<compile_context>
chip_gen: v5e
topology: v5e:2x2
jax: 0.10.0
libtpu: 0.0.40
codegen_flags: <defaults>
</compile_context>

<pallas_src>
import functools

import jax
import jax.numpy as jnp
from jax.experimental import pallas as pl
from jax.experimental.pallas import tpu as pltpu


VMEM_LIMIT_BYTES = 32 * 1024 * 1024          # safe scoped-VMEM limit on all gens
FUSED_MAX_ELEMS = 1 << 20                    # C*HW elems: f32 working slab <= 4 MiB
BLOCK_BUDGET_BYTES = 4 * 1024 * 1024         # ~4 MiB/block streaming tiles


# ----------------------------- kernels ------------------------------------- #

def _fused_kernel(x_ref, w_ref, o_ref, *, hw_total: int, k_size: int):
    # x_ref : VMEM (1, C, HW)      one batch element, fully resident
    # w_ref : VMEM (k, C, 1) f32   conv taps pre-broadcast over channels
    # o_ref : VMEM (1, C, HW)
    C = x_ref.shape[1]

    # Global average pool (sum over lanes, f32 accumulation).
    sums = jnp.sum(x_ref[0].astype(jnp.float32), axis=-1, keepdims=True)  # (C, 1)
    mean = sums * (1.0 / hw_total)

    # k-tap cross-correlation over channels with zero padding:
    #   conv[c] = sum_i w[i] * mean[c + i - pad]
    pad = (k_size - 1) // 2
    conv = jnp.zeros_like(mean)
    for i in range(k_size):
        d = i - pad                      # static shift
        if d == 0:
            shifted = mean
        elif d > 0:
            if d >= C:
                shifted = jnp.zeros_like(mean)
            else:
                shifted = jnp.concatenate(
                    [mean[d:, :], jnp.zeros((d, 1), jnp.float32)], axis=0)
        else:
            if -d >= C:
                shifted = jnp.zeros_like(mean)
            else:
                shifted = jnp.concatenate(
                    [jnp.zeros((-d, 1), jnp.float32), mean[:C + d, :]], axis=0)
        conv = conv + w_ref[i] * shifted

    gate = jax.nn.sigmoid(conv).astype(o_ref.dtype)          # (C, 1)
    o_ref[0] = x_ref[0] * gate                                # broadcast over HW


def _pool_kernel(x_ref, o_ref, acc_ref, *, hw_total: int, hw_tile: int,
                 nt_total: int, nt_inner: int, needs_mask: bool):
    # x_ref  : VMEM (1, C, hw_tile)   one HW tile of one batch element
    # o_ref  : VMEM (1, 1, C, 1) f32  per-(batch, split) channel SUM (written once)
    # acc_ref: VMEM (C, lane_w) f32   lane-parallel accumulator scratch
    s = pl.program_id(1)
    t = pl.program_id(2)

    @pl.when(t == 0)
    def _():
        acc_ref[...] = jnp.zeros_like(acc_ref)

    x = x_ref[0].astype(jnp.float32)                 # (C, hw_tile)
    lane_w = acc_ref.shape[-1]
    nchunk = hw_tile // lane_w

    def accumulate(xv):
        # Pure VPU vreg-column adds; no cross-lane work, no narrow stores.
        part = xv[:, 0:lane_w]
        for j in range(1, nchunk):
            part = part + xv[:, j * lane_w:(j + 1) * lane_w]
        acc_ref[...] += part

    if needs_mask:
        t_g = s * nt_inner + t                       # global HW-tile index
        is_last = t_g == nt_total - 1

        @pl.when(is_last)
        def _():
            lane = jax.lax.broadcasted_iota(jnp.int32, x.shape, dimension=1)
            accumulate(jnp.where(t_g * hw_tile + lane < hw_total, x, 0.0))

        @pl.when(jnp.logical_not(is_last))
        def _():
            accumulate(x)
    else:
        accumulate(x)

    @pl.when(t == nt_inner - 1)
    def _():
        # Single cross-lane collapse + single (C, 1) store per (batch, split).
        o_ref[...] = jnp.sum(acc_ref[...], axis=-1, keepdims=True)[None, None]


def _mul_kernel(x_ref, g_ref, o_ref):
    # x_ref : VMEM (1, C, hw_tile)
    # g_ref : VMEM (1, C, 1)   gate, already in x dtype
    # o_ref : VMEM (1, C, hw_tile)
    o_ref[0] = x_ref[0] * g_ref[0]


# ----------------------------- wrapper -------------------------------------- #

def _choose_hw_tile(C: int, HW: int, itemsize: int, block_budget_bytes: int) -> int:
    """Lane-dense HW tile (multiple of 128 or full HW), ~block_budget per block."""
    if HW <= 128:
        # TODO(synk): tile the channel axis for HW < 128 with very large C.
        return HW
    budget_lanes = block_budget_bytes // max(1, C * itemsize)
    budget_lanes = max(128, (budget_lanes // 128) * 128)
    cap = min(budget_lanes, (HW // 128) * 128)
    # Prefer a tile that divides HW (no masked remainder tile), but do not
    # shrink below half the budget just to get one.
    t = cap
    while t >= max(128, cap // 2):
        if HW % t == 0:
            return t
        t -= 128
    return cap


def eca_attention(x, weight, k_size=3, *,
                  fused_max_elems=FUSED_MAX_ELEMS,
                  block_budget_bytes=BLOCK_BUDGET_BYTES,
                  force_two_pass=False):
    """x: (B, C, H, W) NCHW, weight: (1, 1, k) Conv1d weight (no bias)."""
    B, C, H, W = x.shape
    HW = H * W
    x2 = x.reshape(B, C, HW)
    itemsize = jnp.dtype(x.dtype).itemsize
    w = weight.reshape(k_size).astype(jnp.float32)

    use_fused = (not force_two_pass) and (C * HW <= fused_max_elems)

    if use_fused:
        # --- Fused single pass: read x once, write once. ---
        w_bc = w.reshape(k_size, 1, 1) * jnp.ones((1, C, 1), jnp.float32)
        out = pl.pallas_call(
            functools.partial(_fused_kernel, hw_total=HW, k_size=k_size),
            out_shape=jax.ShapeDtypeStruct((B, C, HW), x.dtype),
            grid_spec=pltpu.PrefetchScalarGridSpec(
                num_scalar_prefetch=0,
                grid=(B,),
                in_specs=[
                    pl.BlockSpec((1, C, HW), lambda b: (b, 0, 0)),
                    pl.BlockSpec((k_size, C, 1), lambda b: (0, 0, 0)),
                ],
                out_specs=pl.BlockSpec((1, C, HW), lambda b: (b, 0, 0)),
            ),
            compiler_params=pltpu.CompilerParams(
                dimension_semantics=("parallel",),
                vmem_limit_bytes=VMEM_LIMIT_BYTES),
            cost_estimate=pl.CostEstimate(
                flops=2 * B * C * HW,
                transcendentals=B * C,
                bytes_accessed=2 * B * C * HW * itemsize),
        )(x2, w_bc)
        return out.reshape(B, C, H, W)

    # --- Two-pass fallback for slabs that do not fit VMEM. ---
    hw_tile = _choose_hw_tile(C, HW, itemsize, block_budget_bytes)
    nt = pl.cdiv(HW, hw_tile)
    needs_mask = (HW % hw_tile) != 0
    # Split the HW reduction across two cores when batch alone can't feed them.
    n_split = 2 if (B == 1 and nt >= 2 and nt % 2 == 0) else 1
    nt_inner = nt // n_split
    lane_w = min(128, hw_tile)

    pool_kernel = functools.partial(
        _pool_kernel, hw_total=HW, hw_tile=hw_tile,
        nt_total=nt, nt_inner=nt_inner, needs_mask=needs_mask)

    partial_sums = pl.pallas_call(
        pool_kernel,
        out_shape=jax.ShapeDtypeStruct((B, n_split, C, 1), jnp.float32),
        grid_spec=pltpu.PrefetchScalarGridSpec(
            num_scalar_prefetch=0,
            grid=(B, n_split, nt_inner),                   # reduction axis last
            in_specs=[pl.BlockSpec(
                (1, C, hw_tile), lambda b, s, t: (b, 0, s * nt_inner + t))],
            out_specs=pl.BlockSpec((1, 1, C, 1), lambda b, s, t: (b, s, 0, 0)),
            scratch_shapes=[pltpu.VMEM((C, lane_w), jnp.float32)],
        ),
        compiler_params=pltpu.CompilerParams(
            dimension_semantics=("parallel", "parallel", "arbitrary"),
            vmem_limit_bytes=VMEM_LIMIT_BYTES),
        cost_estimate=pl.CostEstimate(
            flops=B * C * HW,
            transcendentals=0,
            bytes_accessed=B * C * HW * itemsize + B * n_split * C * 4),
    )(x2)

    # Tiny glue on B*C scalars: combine split partials, mean, k-tap conv, sigmoid.
    y = jnp.sum(partial_sums[..., 0], axis=1) * (1.0 / HW)        # (B, C)
    pad = (k_size - 1) // 2
    ypad = jnp.pad(y, ((0, 0), (pad, pad)))                       # (B, C + k - 1)
    conv = sum(w[i] * ypad[:, i:i + C] for i in range(k_size))    # (B, C)
    gate = jax.nn.sigmoid(conv).astype(x.dtype)[:, :, None]       # (B, C, 1)

    out = pl.pallas_call(
        _mul_kernel,
        out_shape=jax.ShapeDtypeStruct((B, C, HW), x.dtype),
        grid_spec=pltpu.PrefetchScalarGridSpec(
            num_scalar_prefetch=0,
            grid=(B, nt),
            in_specs=[
                pl.BlockSpec((1, C, hw_tile), lambda b, t: (b, 0, t)),
                pl.BlockSpec((1, C, 1), lambda b, t: (b, 0, 0)),
            ],
            out_specs=pl.BlockSpec((1, C, hw_tile), lambda b, t: (b, 0, t)),
        ),
        compiler_params=pltpu.CompilerParams(
            dimension_semantics=("parallel", "parallel"),
            vmem_limit_bytes=VMEM_LIMIT_BYTES),
        cost_estimate=pl.CostEstimate(
            flops=B * C * HW,
            transcendentals=0,
            bytes_accessed=2 * B * C * HW * itemsize + B * C * itemsize),
    )(x2, gate)

    return out.reshape(B, C, H, W)


# ----------------------------- reference ------------------------------------ #

def _reference_eca(x, weight, k_size=3):
    # Pure-JAX reference mirroring the PyTorch forward.
    B, C, H, W = x.shape
    pad = (k_size - 1) // 2
    y = jnp.mean(x, axis=(2, 3))                               # (B, C)
    ypad = jnp.pad(y, ((0, 0), (pad, pad)))                    # (B, C + k - 1)
    w = weight.reshape(k_size)
    conv = sum(w[i] * ypad[:, i:i + C] for i in range(k_size))
    s = jax.nn.sigmoid(conv)[:, :, None, None]                 # (B, C, 1, 1)
    return x * s


if __name__ == "__main__":
    key = jax.random.PRNGKey(0)
    kx, kw = jax.random.split(key)
    k_size = 3
    # Conv1d(1, 1, k_size, bias=False) weight, shape (1, 1, k_size).
    weight = jax.random.normal(kw, (1, 1, k_size), dtype=jnp.float32) * 0.5

    # Primary test: fused single-pass path (slab resident in VMEM).
    x = jax.random.normal(kx, (2, 4, 16, 16), dtype=jnp.float32)
    out = jax.block_until_ready(eca_attention(x, weight, k_size=k_size))
    ref = _reference_eca(x, weight, k_size=k_size)
    assert out.shape == x.shape and out.dtype == x.dtype
    assert jnp.allclose(out, ref, atol=1e-5, rtol=1e-5), "fused path mismatch"

    # Fallback two-pass path at small shapes (tiny block budget forces tiling):
    #   (2,8,16,16): plain tiled reduction, no mask
    #   (2,8,12,12): masked remainder HW tile
    #   (1,8,16,16): B==1 split reduction across two grid partitions
    for shape in [(2, 8, 16, 16), (2, 8, 12, 12), (1, 8, 16, 16)]:
        xi = jax.random.normal(jax.random.PRNGKey(1), shape, dtype=jnp.float32)
        oi = jax.block_until_ready(
            eca_attention(xi, weight, k_size=k_size,
                          force_two_pass=True, block_budget_bytes=4096))
        ri = _reference_eca(xi, weight, k_size=k_size)
        assert oi.shape == xi.shape and oi.dtype == xi.dtype
        assert jnp.allclose(oi, ri, atol=1e-5, rtol=1e-5), f"two-pass mismatch {shape}"

    print("KERNEL_OK")
</pallas_src>

<mosaic_0001>
module attributes {stable_mosaic.version = 11 : i64} {
  func.func @_fused_kernel(%arg0: i32, %arg1: memref<1x4x256xf32, #tpu.memory_space<vmem>>, %arg2: memref<3x4x1xf32, #tpu.memory_space<vmem>>, %arg3: memref<1x4x256xf32, #tpu.memory_space<vmem>>) attributes {dimension_semantics = [#tpu.dimension_semantics<parallel>], iteration_bounds = array<i64: 2>, scalar_prefetch = 0 : i64, scratch_operands = 0 : i64, tpu.core_type = #tpu.core_type<tc>, window_params = [{transform_indices = @transform_0, window_bounds = array<i64: 1, 4, 256>}, {pipeline_mode = #tpu.pipeline_mode<synchronous>, transform_indices = @transform_1, window_bounds = array<i64: 3, 4, 1>}, {transform_indices = @transform_2, window_bounds = array<i64: 1, 4, 256>}]} {
    %c0 = arith.constant 0 : index
    %c0_0 = arith.constant 0 : index
    %c0_1 = arith.constant 0 : index
    %0 = vector.load %arg1[%c0, %c0_0, %c0_1] : memref<1x4x256xf32, #tpu.memory_space<vmem>>, vector<1x4x256xf32>
    %1 = vector.shape_cast %0 : vector<1x4x256xf32> to vector<4x256xf32>
    %cst = arith.constant dense<0.000000e+00> : vector<4xf32>
    %2 = vector.multi_reduction <add>, %1, %cst [1] : vector<4x256xf32> to vector<4xf32>
    %3 = vector.shape_cast %2 : vector<4xf32> to vector<4x1xf32>
    %cst_2 = arith.constant 3.906250e-03 : f32
    %4 = vector.broadcast %cst_2 : f32 to vector<4x1xf32>
    %5 = arith.mulf %3, %4 : vector<4x1xf32>
    %cst_3 = arith.constant 0.000000e+00 : f32
    %6 = vector.broadcast %cst_3 : f32 to vector<4x1xf32>
    %cst_4 = arith.constant 0.000000e+00 : f32
    %7 = vector.broadcast %cst_4 : f32 to vector<1x1xf32>
    %8 = vector.extract_strided_slice %5 {offsets = [0, 0], sizes = [3, 1], strides = [1, 1]} : vector<4x1xf32> to vector<3x1xf32>
    %9 = tpu.concatenate %7, %8 in 0 : vector<1x1xf32>, vector<3x1xf32> -> vector<4x1xf32>
    %c0_5 = arith.constant 0 : index
    %c0_6 = arith.constant 0 : index
    %c0_7 = arith.constant 0 : index
    %10 = vector.load %arg2[%c0_5, %c0_6, %c0_7] : memref<3x4x1xf32, #tpu.memory_space<vmem>>, vector<1x4x1xf32>
    %11 = vector.shape_cast %10 : vector<1x4x1xf32> to vector<4x1xf32>
    %12 = arith.mulf %11, %9 : vector<4x1xf32>
    %13 = arith.addf %6, %12 : vector<4x1xf32>
    %c1 = arith.constant 1 : index
    %c0_8 = arith.constant 0 : index
    %c0_9 = arith.constant 0 : index
    %14 = vector.load %arg2[%c1, %c0_8, %c0_9] : memref<3x4x1xf32, #tpu.memory_space<vmem>>, vector<1x4x1xf32>
    %15 = vector.shape_cast %14 : vector<1x4x1xf32> to vector<4x1xf32>
    %16 = arith.mulf %15, %5 : vector<4x1xf32>
    %17 = arith.addf %13, %16 : vector<4x1xf32>
    %18 = vector.extract_strided_slice %5 {offsets = [1, 0], sizes = [3, 1], strides = [1, 1]} : vector<4x1xf32> to vector<3x1xf32>
    %cst_10 = arith.constant 0.000000e+00 : f32
    %19 = vector.broadcast %cst_10 : f32 to vector<1x1xf32>
    %20 = tpu.concatenate %18, %19 in 0 : vector<3x1xf32>, vector<1x1xf32> -> vector<4x1xf32>
    %c2 = arith.constant 2 : index
    %c0_11 = arith.constant 0 : index
    %c0_12 = arith.constant 0 : index
    %21 = vector.load %arg2[%c2, %c0_11, %c0_12] : memref<3x4x1xf32, #tpu.memory_space<vmem>>, vector<1x4x1xf32>
    %22 = vector.shape_cast %21 : vector<1x4x1xf32> to vector<4x1xf32>
    %23 = arith.mulf %22, %20 : vector<4x1xf32>
    %24 = arith.addf %17, %23 : vector<4x1xf32>
    %25 = arith.negf %24 : vector<4x1xf32>
    %26 = math.exp %25 : vector<4x1xf32>
    %cst_13 = arith.constant 1.000000e+00 : f32
    %27 = vector.broadcast %cst_13 : f32 to vector<4x1xf32>
    %28 = arith.addf %27, %26 : vector<4x1xf32>
    %29 = arith.divf %27, %28 : vector<4x1xf32>
    %c0_14 = arith.constant 0 : index
    %c0_15 = arith.constant 0 : index
    %c0_16 = arith.constant 0 : index
    %30 = vector.load %arg1[%c0_14, %c0_15, %c0_16] : memref<1x4x256xf32, #tpu.memory_space<vmem>>, vector<1x4x256xf32>
    %31 = vector.shape_cast %30 : vector<1x4x256xf32> to vector<4x256xf32>
    %32 = vector.broadcast %29 : vector<4x1xf32> to vector<4x256xf32>
    %33 = arith.mulf %31, %32 : vector<4x256xf32>
    %c0_17 = arith.constant 0 : index
    %c0_18 = arith.constant 0 : index
    %c0_19 = arith.constant 0 : index
    %34 = vector.load %arg3[%c0_17, %c0_18, %c0_19] : memref<1x4x256xf32, #tpu.memory_space<vmem>>, vector<1x4x256xf32>
    %35 = vector.shape_cast %34 : vector<1x4x256xf32> to vector<4x256xf32>
    %36 = vector.shape_cast %33 : vector<4x256xf32> to vector<1x4x256xf32>
    tpu.vector_store %arg3[%c0_17, %c0_18, %c0_19], %36 {strides = array<i32>} : memref<1x4x256xf32, #tpu.memory_space<vmem>>, vector<1x4x256xf32>,
    return
  }
  func.func @transform_0(%arg0: i32) -> (i32, i32, i32) {
    %c0_i32 = arith.constant 0 : i32
    %c0_i32_0 = arith.constant 0 : i32
    %c0_i32_1 = arith.constant 0 : i32
    return %arg0, %c0_i32, %c0_i32_0 : i32, i32, i32
  }
  func.func @transform_1(%arg0: i32) -> (i32, i32, i32) {
    %c0_i32 = arith.constant 0 : i32
    %c0_i32_0 = arith.constant 0 : i32
    %c0_i32_1 = arith.constant 0 : i32
    %c0_i32_2 = arith.constant 0 : i32
    return %c0_i32, %c0_i32_0, %c0_i32_1 : i32, i32, i32
  }
  func.func @transform_2(%arg0: i32) -> (i32, i32, i32) {
    %c0_i32 = arith.constant 0 : i32
    %c0_i32_0 = arith.constant 0 : i32
    %c0_i32_1 = arith.constant 0 : i32
    return %arg0, %c0_i32, %c0_i32_0 : i32, i32, i32
  }
}

</mosaic_0001>

<llo_original>
// kernel: tpu_custom_call.1
$region0: #{tpu_custom_call.1}
  #allocation0 [shape = 'u32[]', space=smem, size = 0x4, offset = 0x4, fixed_abs, tag = 'smem constant byte address 0x4 - core index']
  #allocation1 [shape = 'u32[72,128]{1,0:T(1,128)}', space=vmem, size = 0x9000, scoped, tag = 'internal scratch']
  %s0 = inlined_call_operand.hbm [shape: f32[2,4,256], index: 0, kind: input, shape index: {}]
  %s1 = inlined_call_operand.vmem [shape: f32[3,4,1], index: 1, kind: input, shape index: {}]
  %s2 = inlined_call_operand.hbm [shape: f32[2,4,256], index: 2, kind: output, shape index: {}]
  %s3 = sld [smem:[#allocation0]]
  $region45: #{tpu_custom_call.1} parent=0
    _
  %s5 = ssub.s32 1, %s3
  %s6 = scalar_select 0, %s5, %s3
  $region1: #{tpu_custom_call.1} parent=0
    #allocation2 [shape = 'u8[8192]{0}', space=vmem, size = 0x2000, scoped, tag = 'input window, operand 0']
    #allocation3 [shape = 's32[2]{0}', space=sflag, size = 0x8, scoped, tag = 'scoped memory for tpu_custom_call.1']
    #allocation4 [shape = 's32[2]{0}', space=sflag, size = 0x8, scoped, tag = 'scoped memory for tpu_custom_call.1']
    #allocation5 [shape = 'u8[8192]{0}', space=vmem, size = 0x2000, scoped, tag = 'output window, operand 0']
    %7 = vsyncpa [#allocation3], 0
    %s8 = scalar_lea.sflag [#allocation3], 1
    %9 = vsyncpa %s8, 0
    %10 = vsyncpa [#allocation4], 0
    %s11 = scalar_lea.sflag [#allocation4], 1
    %12 = vsyncpa %s11, 0
    loop: start=0, step=1, limit=4
    $region2: #{tpu_custom_call.1} parent=1 // loop_pre_header
      _
    $region3: #{tpu_custom_call.1} parent=1 // loop_header
      %s14 = sphi 0, %s18
      %p15 = scmp.ge.s32.totalorder %s14, 4
      %s24 = sphi 0, %s26
      %s27 = sphi 0, %s24
      %s28 = sphi 0, %s27
      %s44 = sphi 0, %s28
      %s48 = sphi 0, %s48
      %s50 = sphi 0, %s48
      %s51 = sphi 0, %s50
      %s65 = sphi 0, %s51
      %s71 = sphi 0, %s73
      %s74 = sphi 0, %s71
      %s75 = sphi 0, %s74
      %s91 = sphi 0, %s75
    $region4: #{tpu_custom_call.1} parent=1 // loop_header_branch
      %17 = sbr.rel (%p15) target = $region8
    $region5: #{tpu_custom_call.1} parent=1 // loop_body
      %s19 = ssub.s32 %s14, 1
      %s20 = ssub.s32 %s14, 2
      %s21 = sadd.s32 %s14, 1
      %s22 = ssub.s32 %s14, %s21
      %p23 = scmp.eq.s32.totalorder %s22, 0
      %s25 = sadd.s32 %s24, 1
      %s26 = scalar_select %p23, %s24, %s25
      %p29 = pneg %p23
      %p30 = scmp.eq.s32.totalorder %s14, 1
      %p31 = por %p29, %p30
      %p32 = scmp.ne.s32.totalorder %s24, %s27
      %p33 = scmp.eq.s32.totalorder %s14, 0
      %p34 = por %p32, %p33
      %p35 = scmp.ne.s32.totalorder %s24, %s27
      %p36 = scmp.eq.s32.totalorder %s19, 1
      %p37 = por %p35, %p36
      %p38 = scmp.ne.s32.totalorder %s27, %s28
      %p39 = scmp.eq.s32.totalorder %s19, 0
      %p40 = por %p38, %p39
      %p41 = scmp.ne.s32.totalorder %s27, %s28
      %p42 = scmp.eq.s32.totalorder %s20, 1
      %p43 = por %p41, %p42
      %p45 = scmp.ne.s32.totalorder %s28, %s44
      %p46 = scmp.eq.s32.totalorder %s20, 0
      %p47 = por %p45, %p46
      %s49 = sadd.s32 %s48, 1
      %p52 = scmp.eq.s32.totalorder %s14, 1
      %p53 = scmp.ne.s32.totalorder %s48, %s50
      %p54 = scmp.eq.s32.totalorder %s14, 0
      %p55 = por %p53, %p54
      %p56 = scmp.ne.s32.totalorder %s48, %s50
      %p57 = scmp.eq.s32.totalorder %s19, 1
      %p58 = por %p56, %p57
      %p59 = scmp.ne.s32.totalorder %s50, %s51
      %p60 = scmp.eq.s32.totalorder %s19, 0
      %p61 = por %p59, %p60
      %p62 = scmp.ne.s32.totalorder %s50, %s51
      %p63 = scmp.eq.s32.totalorder %s20, 1
      %p64 = por %p62, %p63
      %p66 = scmp.ne.s32.totalorder %s51, %s65
      %p67 = scmp.eq.s32.totalorder %s20, 0
      %p68 = por %p66, %p67
      %s69 = ssub.s32 %s14, %s21
      %p70 = scmp.eq.s32.totalorder %s69, 0
      %s72 = sadd.s32 %s71, 1
      %s73 = scalar_select %p70, %s71, %s72
      %p76 = pneg %p70
      %p77 = scmp.eq.s32.totalorder %s14, 1
      %p78 = por %p76, %p77
      %p79 = scmp.ne.s32.totalorder %s71, %s74
      %p80 = scmp.eq.s32.totalorder %s14, 0
      %p81 = por %p79, %p80
      %p82 = scmp.ne.s32.totalorder %s71, %s74
      %p83 = scmp.eq.s32.totalorder %s19, 1
      %p84 = por %p82, %p83
      %p85 = scmp.ne.s32.totalorder %s74, %s75
      %p86 = scmp.eq.s32.totalorder %s19, 0
      %p87 = por %p85, %p86
      %p88 = scmp.ne.s32.totalorder %s74, %s75
      %p89 = scmp.eq.s32.totalorder %s20, 1
      %p90 = por %p88, %p89
      %p92 = scmp.ne.s32.totalorder %s75, %s91
      %p93 = scmp.eq.s32.totalorder %s20, 0
      %p94 = por %p92, %p93
      %p95 = scmp.le.s32.totalorder 1, %s14
      %p96 = scmp.lt.s32.totalorder %s14, 3
      %p97 = pnand %p95, %p96
      %p98 = pneg %p97
      // Predicated region
      $region9: #{tpu_custom_call.1} parent=5 // pred_check
        _
      $region10: #{tpu_custom_call.1} parent=5 // pred_check_branch
        %100 = sbr.rel (%p97) target = $region12
      $region11: #{tpu_custom_call.1} parent=5 // pred_region
        %s101 = ssub.s32 %s14, 1
        // Predicated region
        $region13: #{tpu_custom_call.1} parent=11 // pred_check
          %p102 = pneg %p61
        $region14: #{tpu_custom_call.1} parent=11 // pred_check_branch
          %104 = sbr.rel (%p102) target = $region16
        $region15: #{tpu_custom_call.1} parent=11 // pred_region
          _
        $region16: #{tpu_custom_call.1} parent=11 // pred_fallthru
          _
      $region12: #{tpu_custom_call.1} parent=5 // pred_fallthru
        _
      %p105 = scmp.lt.s32.totalorder %s14, 2
      // Predicated region
      $region17: #{tpu_custom_call.1} parent=5 // pred_check
        %p106 = pneg %p105
      $region18: #{tpu_custom_call.1} parent=5 // pred_check_branch
        %108 = sbr.rel (%p106) target = $region20
      $region19: #{tpu_custom_call.1} parent=5 // pred_region
        // Predicated region
        $region21: #{tpu_custom_call.1} parent=19 // pred_check
          %p109 = pneg %p34
        $region22: #{tpu_custom_call.1} parent=19 // pred_check_branch
          %111 = sbr.rel (%p109) target = $region24
        $region23: #{tpu_custom_call.1} parent=19 // pred_region
          %s112 = sand.u32 %s24, 1
          %s113 = scalar_lea.sflag [#allocation3], %s112
          %s114 = sand.u32 %s24, 1
          %s115 = smul.addr %s114, 8
          %s116 = scalar_lea.vmem [#allocation2], %s115
          %118 = vsyncadd %s113, 0
          %s119 = smul.addr %s14, 2
          %s120 = smul.addr %s119, 4
          %s121 = scalar_lea.hbm %s0, %s120
          %s123 = sshll.u32 %s121, 4
          %s124 = int_to_ptr.hbm [resolvable:$true] %s123
          %s125 = sshll.u32 %s116, 4
          %s126 = int_to_ptr.vmem [resolvable:$true] %s125
          %128 = dma.hbm_to_vmem [thread:$0]  %s124, 128, %s126, %s113
        $region24: #{tpu_custom_call.1} parent=19 // pred_fallthru
          _
      $region20: #{tpu_custom_call.1} parent=5 // pred_fallthru
        _
      %p129 = scmp.le.s32.totalorder 1, %s14
      %p130 = scmp.lt.s32.totalorder %s14, 3
      %p131 = pnand %p129, %p130
      %p132 = pneg %p131
      // Predicated region
      $region25: #{tpu_custom_call.1} parent=5 // pred_check
        _
      $region26: #{tpu_custom_call.1} parent=5 // pred_check_branch
        %134 = sbr.rel (%p131) target = $region28
      $region27: #{tpu_custom_call.1} parent=5 // pred_region
        %s135 = ssub.s32 %s14, 1
        %s136 = sand.u32 %s27, 1
        %s137 = scalar_lea.sflag [#allocation3], %s136
        %s138 = sand.u32 %s27, 1
        %s139 = smul.addr %s138, 8
        %s140 = scalar_lea.vmem [#allocation2], %s139
        // Predicated region
        $region29: #{tpu_custom_call.1} parent=27 // pred_check
          %p141 = pneg %p40
        $region30: #{tpu_custom_call.1} parent=27 // pred_check_branch
          %143 = sbr.rel (%p141) target = $region32
        $region31: #{tpu_custom_call.1} parent=27 // pred_region
          %145 = dma.done %s137, 128
        $region32: #{tpu_custom_call.1} parent=27 // pred_fallthru
          _
        %s146 = sand.u32 %s27, 1
        %s147 = scalar_lea.sflag [#allocation3], %s146
        %s148 = sand.u32 %s27, 1
        %s149 = smul.addr %s148, 8
        %s150 = scalar_lea.vmem [#allocation2], %s149
        %p151 = pneg %p40
        %p152 = pneg %p37
        %p153 = pneg %p61
        %p154 = pneg %p58
        %p155 = pneg %p87
        %p156 = pneg %p84
        %s157 = sand.u32 %s74, 1
        %s158 = scalar_lea.sflag [#allocation4], %s157
        %s159 = sand.u32 %s74, 1
        %s160 = smul.addr %s159, 8
        %s161 = scalar_lea.vmem [#allocation5], %s160
        %v162 = vld [vmem:[%s140] sm:$0xff]
        %164 = vst [vmem:[#allocation1] ss:$2 sm:$0xff] %v162
        %v165 = vld.sshfl [vmem:[#allocation1] sm:$0xff pattern:$0x75316420]
        %v166 = vld.sshfl [vmem:[#allocation1 + $0x8] sm:$0xff pattern:$0x75316420]
        %vm169 = vcmask 1043456
        %v170 = vsel %vm169, %v165, 0.0
        %v171 = vsel %vm169, %v166, 0.0
        %v172 = vadd.f32 %v170, %v171
        %173 = vadd.xlane.f32.xlu0 %v172
        %v174 = vpop.xlane.xlu0 %173
        %v175 = vmul.f32 %v174, 0.00390625
        %v177 = vrot.slane %v175, 7
        %vm179 = vcmask 1040384
        %v180 = vsel %vm179, 0.0, %v177
        %v181 = vld [vmem:[%s1] sm:$0xf]
        %v182 = vmul.f32 %v181, %v180
        %v183 = vadd.f32 %v182, 0.0
        %s184 = scalar_lea.vmem %s1, 4
        %v185 = vld [vmem:[%s184] sm:$0xf]
        %v186 = vmul.f32 %v185, %v175
        %v187 = vadd.f32 %v183, %v186
        %v188 = vrot.slane %v175, 1
        %vm190 = vcmask 1042432
        %v191 = vsel %vm190, %v188, 0.0
        %s192 = scalar_lea.vmem %s1, 8
        %v193 = vld [vmem:[%s192] sm:$0xf]
        %v194 = vmul.f32 %v193, %v191
        %v195 = vadd.f32 %v187, %v194
        %v196 = vxor.u32 %v195, 2147483648
        %v197 = vmul.f32 %v196, 1.442695
        %v198 = vpow.pop %v197
        %v199 = vadd.f32 %v198, 1.0
        %v200 = vrcp.pop %v199
        %v201 = vmul.f32 %v199, %v200
        %v202 = vsub.f32 1.0, %v201
        %v203 = vmul.f32 %v200, %v202
        %v204 = vadd.f32 %v200, %v203
        %vm205 = vweird.f32 %v199
        %vm206 = vweird.f32 %v200
        %vm207 = vmor %vm205, %vm206
        %v208 = vsel %vm207, %v200, %v204
        %v209 = vand.u32 2147483647, %v199
        %vm210 = vcmp.eq.f32.partialorder %v209, 8.507059e+37
        %v211 = vand.u32 %v199, 2147483648
        %v212 = vor.u32 1.1754944e-38, %v211
        %v213 = vsel %vm210, %v212, %v208
        %v214 = vmul.f32 1.0, %v213
        %216 = vset.pattern.permute.xlu0 0
        %217 = vperm.xlu0 %216, %v214
        %v218 = vpop.permute.xlu0 %217
        %v220 = vunpack.c.l.s4 839922192
        %v221 = vunpack.c.0.s8 %v220
        %v222 = vperm.slane %v218, %v221
        %v224 = vmul.f32 %v162, %v222
        %225 = vst [vmem:[%s161] sm:$0xff] %v224
        %s226 = sand.u32 %s74, 1
        %s227 = scalar_lea.sflag [#allocation4], %s226
        %s228 = sand.u32 %s74, 1
        %s229 = smul.addr %s228, 8
        %s230 = scalar_lea.vmem [#allocation5], %s229
        // Predicated region
        $region33: #{tpu_custom_call.1} parent=27 // pred_check
          %p231 = pneg %p84
        $region34: #{tpu_custom_call.1} parent=27 // pred_check_branch
          %233 = sbr.rel (%p231) target = $region36
        $region35: #{tpu_custom_call.1} parent=27 // pred_region
          %235 = vsyncadd %s227, 0
          %s236 = smul.addr %s19, 2
          %s237 = smul.addr %s236, 4
          %s238 = scalar_lea.hbm %s2, %s237
          %s240 = sshll.u32 %s230, 4
          %s241 = int_to_ptr.vmem [resolvable:$true] %s240
          %s242 = sshll.u32 %s238, 4
          %s243 = int_to_ptr.hbm [resolvable:$true] %s242
          %245 = dma.vmem_to_hbm [thread:$0]  %s241, 128, %s243, %s227
        $region36: #{tpu_custom_call.1} parent=27 // pred_fallthru
          _
      $region28: #{tpu_custom_call.1} parent=5 // pred_fallthru
        _
      %p246 = scmp.le.s32.totalorder 2, %s14
      // Predicated region
      $region37: #{tpu_custom_call.1} parent=5 // pred_check
        %p247 = pneg %p246
      $region38: #{tpu_custom_call.1} parent=5 // pred_check_branch
        %249 = sbr.rel (%p247) target = $region40
      $region39: #{tpu_custom_call.1} parent=5 // pred_region
        %s250 = ssub.s32 %s14, 2
        // Predicated region
        $region41: #{tpu_custom_call.1} parent=39 // pred_check
          %p251 = pneg %p90
        $region42: #{tpu_custom_call.1} parent=39 // pred_check_branch
          %253 = sbr.rel (%p251) target = $region44
        $region43: #{tpu_custom_call.1} parent=39 // pred_region
          %s254 = sand.u32 %s75, 1
          %s255 = scalar_lea.sflag [#allocation4], %s254
          %s256 = sand.u32 %s75, 1
          %s257 = smul.addr %s256, 8
          %s258 = scalar_lea.vmem [#allocation5], %s257
          %260 = dma.done %s255, 128
        $region44: #{tpu_custom_call.1} parent=39 // pred_fallthru
          _
      $region40: #{tpu_custom_call.1} parent=5 // pred_fallthru
        _
    $region6: #{tpu_custom_call.1} parent=1 // loop_footer
      %s18 = sadd.s32 1, %s14
    $region7: #{tpu_custom_call.1} parent=1 // loop_footer_branch
      %13 = sbr.rel target = $region3
    $region8: #{tpu_custom_call.1} parent=1 // loop_exit
      _
    %261 = vsyncpa [#allocation3], 1
    %s262 = scalar_lea.sflag [#allocation3], 1
    %263 = vsyncpa %s262, 1
    %264 = vsyncpa [#allocation4], 1
    %s265 = scalar_lea.sflag [#allocation4], 1
    %266 = vsyncpa %s265, 1

</llo_original>
